<compile_context>
chip_gen: v5e
topology: v5e:2x2
jax: 0.10.0
libtpu: 0.0.40
codegen_flags: <defaults>
</compile_context>

<pallas_src>
import math
from functools import partial

import jax
import jax.numpy as jnp
from jax import lax
from jax.experimental import pallas as pl
from jax.experimental.pallas import tpu as pltpu


def _flash_attn_kernel(q_ref, k_ref, v_ref, wp_ref, o_ref,
                       m_scr, l_scr, acc_scr, *, heads, unroll):
    """Grid = (batch, q_tile, kv_tile); kv_tile is the (arbitrary) reduction axis.

    q_ref:  (heads, tq, dqk) bf16   (scale already folded in)
    k_ref:  (heads, tk, dqk) bf16
    v_ref:  (heads, tk, dv)  bf16
    wp_ref: (heads, dv, C)   bf16   (Wproj^T split per head)
    o_ref:  (tq, C)
    """
    ki = pl.program_id(2)
    nk = pl.num_programs(2)

    # ---- per-(batch, q-tile) init: reset online-softmax state ----------------
    @pl.when(ki == 0)
    def _init():
        m_scr[...] = jnp.full(m_scr.shape, -jnp.inf, m_scr.dtype)
        l_scr[...] = jnp.zeros(l_scr.shape, l_scr.dtype)
        acc_scr[...] = jnp.zeros(acc_scr.shape, acc_scr.dtype)

    # ---- per-head online-softmax update (leading-axis head indexing) ---------
    def head_step(h, carry):
        qh = q_ref[h]                                             # (tq, dqk) bf16
        kh = k_ref[h]                                             # (tk, dqk) bf16
        vh = v_ref[h]                                             # (tk, dv)  bf16

        # scores = (q * scale) @ k^T  (scale already folded into q)
        s = lax.dot_general(qh, kh, (((1,), (1,)), ((), ())),
                            preferred_element_type=jnp.float32)   # (tq, tk) f32

        m_prev = m_scr[h]                                         # (tq, 1)
        m_new = jnp.maximum(m_prev, jnp.max(s, axis=-1, keepdims=True))
        alpha = jnp.exp(m_prev - m_new)
        p = jnp.exp(s - m_new)                                    # (tq, tk) f32
        l_scr[h] = alpha * l_scr[h] + jnp.sum(p, axis=-1, keepdims=True)
        acc_scr[h] = alpha * acc_scr[h] + jnp.dot(
            p.astype(jnp.bfloat16), vh, preferred_element_type=jnp.float32)
        m_scr[h] = m_new
        return carry

    lax.fori_loop(0, heads, head_step, 0, unroll=unroll)

    # ---- finalize: normalize per head and fold the output projection in ------
    @pl.when(ki == nk - 1)
    def _finalize():
        tq, c_out = o_ref.shape

        def proj_step(h, out_acc):
            o_h = (acc_scr[h] * pl.reciprocal(l_scr[h], approx=True)
                   ).astype(jnp.bfloat16)                         # (tq, dv) bf16
            return out_acc + jnp.dot(o_h, wp_ref[h],
                                     preferred_element_type=jnp.float32)

        out = lax.fori_loop(0, heads, proj_step,
                            jnp.zeros((tq, c_out), jnp.float32), unroll=unroll)
        o_ref[...] = out.astype(o_ref.dtype)


def attention_pallas(x, wq, wk, wv, wproj, *, heads, q_tile=256, kv_tile=512,
                     vmem_limit_bytes=48 * 1024 * 1024):
    """x: (B, N, C).  wq/wk: (qk_dim, C), wv/wproj: (C, C) — PyTorch (out, in)."""
    B, N, C = x.shape
    qk_dim = wq.shape[0]
    assert qk_dim % heads == 0 and C % heads == 0
    dqk = qk_dim // heads
    dv = C // heads
    scale = 1.0 / math.sqrt(dqk)                    # SDPA default scale

    tq = min(q_tile, N)
    tk = min(kv_tile, N)
    assert N % tq == 0 and N % tk == 0, "sequence length must divide the flash tiles"
    nq, nk = N // tq, N // tk

    # ---- Q/K/V projections once per token (bf16 MXU, f32 accumulation),
    #      reshaped to (B, heads, N, d) for leading-axis head indexing. --------
    xb = x.astype(jnp.bfloat16)
    wq_t = wq.T.astype(jnp.bfloat16)                # (C, qk_dim)
    wk_t = wk.T.astype(jnp.bfloat16)                # (C, qk_dim)
    wv_t = wv.T.astype(jnp.bfloat16)                # (C, C)
    wp_h = wproj.T.reshape(heads, dv, C).astype(jnp.bfloat16)   # per-head Wproj^T

    def split_heads(t, d):
        return t.reshape(B, N, heads, d).transpose(0, 2, 1, 3).astype(jnp.bfloat16)

    q = split_heads(
        jnp.einsum('bnc,cq->bnq', xb, wq_t,
                   preferred_element_type=jnp.float32) * scale, dqk)
    k = split_heads(
        jnp.einsum('bnc,cq->bnq', xb, wk_t,
                   preferred_element_type=jnp.float32), dqk)
    v = split_heads(
        jnp.einsum('bnc,cd->bnd', xb, wv_t,
                   preferred_element_type=jnp.float32), dv)

    kernel = partial(_flash_attn_kernel, heads=heads, unroll=heads <= 4)

    return pl.pallas_call(
        kernel,
        out_shape=jax.ShapeDtypeStruct((B, N, C), x.dtype),
        grid_spec=pltpu.PrefetchScalarGridSpec(
            num_scalar_prefetch=0,
            grid=(B, nq, nk),
            in_specs=[
                pl.BlockSpec((None, heads, tq, dqk),
                             lambda b, qi, ki: (b, 0, qi, 0)),    # Q tile
                pl.BlockSpec((None, heads, tk, dqk),
                             lambda b, qi, ki: (b, 0, ki, 0)),    # K tile
                pl.BlockSpec((None, heads, tk, dv),
                             lambda b, qi, ki: (b, 0, ki, 0)),    # V tile
                pl.BlockSpec((heads, dv, C),
                             lambda b, qi, ki: (0, 0, 0)),        # Wproj^T per head
            ],
            out_specs=pl.BlockSpec((None, tq, C), lambda b, qi, ki: (b, qi, 0)),
            scratch_shapes=[
                pltpu.VMEM((heads, tq, 1), jnp.float32),     # running max  m
                pltpu.VMEM((heads, tq, 1), jnp.float32),     # running sum  l
                pltpu.VMEM((heads, tq, dv), jnp.float32),    # running P@V  acc
            ],
        ),
        compiler_params=pltpu.CompilerParams(
            dimension_semantics=("parallel", "parallel", "arbitrary"),
            vmem_limit_bytes=vmem_limit_bytes,
        ),
    )(q, k, v, wp_h)


def attention_reference(x, wq, wk, wv, wproj, *, heads):
    """Pure-JAX f32 reference mirroring the PyTorch forward."""
    B, N, C = x.shape
    qk_dim = wq.shape[0]
    dqk = qk_dim // heads
    dv = C // heads
    q = jnp.einsum('bnc,qc->bnq', x, wq).reshape(B, N, heads, dqk).transpose(0, 2, 1, 3)
    k = jnp.einsum('bnc,qc->bnq', x, wk).reshape(B, N, heads, dqk).transpose(0, 2, 1, 3)
    v = jnp.einsum('bnc,oc->bno', x, wv).reshape(B, N, heads, dv).transpose(0, 2, 1, 3)
    s = jnp.einsum('bhnd,bhmd->bhnm', q, k) / math.sqrt(dqk)
    p = jax.nn.softmax(s, axis=-1)
    o = jnp.einsum('bhnm,bhmd->bhnd', p, v)
    o = o.transpose(0, 2, 1, 3).reshape(B, N, C)
    return jnp.einsum('bnc,oc->bno', o, wproj)


if __name__ == "__main__":
    # Small shapes consistent with the module's forward: x is (b, n, dim).
    # Tiles are forced to 8 so the test exercises multiple q-tiles and multiple
    # online-softmax kv steps (grid = (2, 2, 2)).
    B, N, DIM, HEADS, QK_DIM = 2, 16, 32, 2, 16

    key = jax.random.PRNGKey(0)
    kx, kq, kk, kv, kp = jax.random.split(key, 5)

    x = jax.random.normal(kx, (B, N, DIM), dtype=jnp.float32)
    # PyTorch-Linear weight shapes: (out_features, in_features).
    wq = jax.random.normal(kq, (QK_DIM, DIM), dtype=jnp.float32) * (1.0 / math.sqrt(DIM))
    wk = jax.random.normal(kk, (QK_DIM, DIM), dtype=jnp.float32) * (1.0 / math.sqrt(DIM))
    wv = jax.random.normal(kv, (DIM, DIM), dtype=jnp.float32) * (1.0 / math.sqrt(DIM))
    wp = jax.random.normal(kp, (DIM, DIM), dtype=jnp.float32) * (1.0 / math.sqrt(DIM))

    out = attention_pallas(x, wq, wk, wv, wp, heads=HEADS, q_tile=8, kv_tile=8)
    out = jax.block_until_ready(out)

    ref = attention_reference(x, wq, wk, wv, wp, heads=HEADS)
    assert out.shape == (B, N, DIM)
    # bf16 MXU inputs + approx reciprocal -> compare against f32 reference with
    # bf16-appropriate tolerance.
    assert jnp.allclose(out, ref, atol=6e-2, rtol=6e-2), "mismatch vs reference"

    print("KERNEL_OK")
</pallas_src>

<mosaic_0001>
module attributes {stable_mosaic.version = 11 : i64} {
  func.func @_flash_attn_kernel(%arg0: i32, %arg1: i32, %arg2: i32, %arg3: memref<1x2x8x8xbf16, #tpu.memory_space<vmem>>, %arg4: memref<1x2x8x8xbf16, #tpu.memory_space<vmem>>, %arg5: memref<1x2x8x16xbf16, #tpu.memory_space<vmem>>, %arg6: memref<2x16x32xbf16, #tpu.memory_space<vmem>>, %arg7: memref<1x8x32xf32, #tpu.memory_space<vmem>>, %arg8: memref<2x8x1xf32, #tpu.memory_space<vmem>>, %arg9: memref<2x8x1xf32, #tpu.memory_space<vmem>>, %arg10: memref<2x8x16xf32, #tpu.memory_space<vmem>>) attributes {dimension_semantics = [#tpu.dimension_semantics<parallel>, #tpu.dimension_semantics<parallel>, #tpu.dimension_semantics<arbitrary>], iteration_bounds = array<i64: 2, 2, 2>, scalar_prefetch = 0 : i64, scratch_operands = 3 : i64, tpu.core_type = #tpu.core_type<tc>, window_params = [{transform_indices = @transform_0, window_bounds = array<i64: 1, 2, 8, 8>}, {transform_indices = @transform_1, window_bounds = array<i64: 1, 2, 8, 8>}, {transform_indices = @transform_2, window_bounds = array<i64: 1, 2, 8, 16>}, {pipeline_mode = #tpu.pipeline_mode<synchronous>, transform_indices = @transform_3, window_bounds = array<i64: 2, 16, 32>}, {transform_indices = @transform_4, window_bounds = array<i64: 1, 8, 32>}]} {
    %c0_i32 = arith.constant 0 : i32
    %0 = arith.cmpi eq, %arg2, %c0_i32 : i32
    %1 = arith.extui %0 : i1 to i32
    %c0_i32_0 = arith.constant 0 : i32
    %2 = arith.cmpi ne, %1, %c0_i32_0 : i32
    scf.if %2 {
      %cst_52 = arith.constant 0xFF800000 : f32
      %102 = vector.broadcast %cst_52 : f32 to vector<2x8x1xf32>
      %c0_53 = arith.constant 0 : index
      %c0_54 = arith.constant 0 : index
      %c0_55 = arith.constant 0 : index
      %103 = vector.load %arg8[%c0_53, %c0_54, %c0_55] : memref<2x8x1xf32, #tpu.memory_space<vmem>>, vector<2x8x1xf32>
      tpu.vector_store %arg8[%c0_53, %c0_54, %c0_55], %102 {strides = array<i32>} : memref<2x8x1xf32, #tpu.memory_space<vmem>>, vector<2x8x1xf32>,
      %cst_56 = arith.constant 0.000000e+00 : f32
      %104 = vector.broadcast %cst_56 : f32 to vector<2x8x1xf32>
      %c0_57 = arith.constant 0 : index
      %c0_58 = arith.constant 0 : index
      %c0_59 = arith.constant 0 : index
      %105 = vector.load %arg9[%c0_57, %c0_58, %c0_59] : memref<2x8x1xf32, #tpu.memory_space<vmem>>, vector<2x8x1xf32>
      tpu.vector_store %arg9[%c0_57, %c0_58, %c0_59], %104 {strides = array<i32>} : memref<2x8x1xf32, #tpu.memory_space<vmem>>, vector<2x8x1xf32>,
      %cst_60 = arith.constant 0.000000e+00 : f32
      %106 = vector.broadcast %cst_60 : f32 to vector<2x8x16xf32>
      %c0_61 = arith.constant 0 : index
      %c0_62 = arith.constant 0 : index
      %c0_63 = arith.constant 0 : index
      %107 = vector.load %arg10[%c0_61, %c0_62, %c0_63] : memref<2x8x16xf32, #tpu.memory_space<vmem>>, vector<2x8x16xf32>
      tpu.vector_store %arg10[%c0_61, %c0_62, %c0_63], %106 {strides = array<i32>} : memref<2x8x16xf32, #tpu.memory_space<vmem>>, vector<2x8x16xf32>,
    } else {
    }
    %c0_i32_1 = arith.constant 0 : i32
    %c0 = arith.constant 0 : index
    %3 = arith.index_cast %c0_i32_1 : i32 to index
    %c0_2 = arith.constant 0 : index
    %c0_3 = arith.constant 0 : index
    %4 = vector.load %arg3[%c0, %3, %c0_2, %c0_3] : memref<1x2x8x8xbf16, #tpu.memory_space<vmem>>, vector<1x1x8x8xbf16>
    %5 = vector.shape_cast %4 : vector<1x1x8x8xbf16> to vector<8x8xbf16>
    %c0_4 = arith.constant 0 : index
    %6 = arith.index_cast %c0_i32_1 : i32 to index
    %c0_5 = arith.constant 0 : index
    %c0_6 = arith.constant 0 : index
    %7 = vector.load %arg4[%c0_4, %6, %c0_5, %c0_6] : memref<1x2x8x8xbf16, #tpu.memory_space<vmem>>, vector<1x1x8x8xbf16>
    %8 = vector.shape_cast %7 : vector<1x1x8x8xbf16> to vector<8x8xbf16>
    %c0_7 = arith.constant 0 : index
    %9 = arith.index_cast %c0_i32_1 : i32 to index
    %c0_8 = arith.constant 0 : index
    %c0_9 = arith.constant 0 : index
    %10 = vector.load %arg5[%c0_7, %9, %c0_8, %c0_9] : memref<1x2x8x16xbf16, #tpu.memory_space<vmem>>, vector<1x1x8x16xbf16>
    %11 = vector.shape_cast %10 : vector<1x1x8x16xbf16> to vector<8x16xbf16>
    %cst = arith.constant dense<0.000000e+00> : vector<8x8xf32>
    %12 = tpu.matmul %5, %8, %cst {dimension_numbers = #tpu.dot_dimension_numbers<[1], [1], [0], [0], [0, 0, 1, 0], [], []>} : vector<8x8xbf16>, vector<8x8xbf16>, vector<8x8xf32> -> vector<8x8xf32>
    %13 = arith.index_cast %c0_i32_1 : i32 to index
    %c0_10 = arith.constant 0 : index
    %c0_11 = arith.constant 0 : index
    %14 = vector.load %arg8[%13, %c0_10, %c0_11] : memref<2x8x1xf32, #tpu.memory_space<vmem>>, vector<1x8x1xf32>
    %15 = vector.shape_cast %14 : vector<1x8x1xf32> to vector<8x1xf32>
    %cst_12 = arith.constant dense<0xFF800000> : vector<8xf32>
    %16 = vector.multi_reduction <maximumf>, %12, %cst_12 [1] : vector<8x8xf32> to vector<8xf32>
    %17 = vector.shape_cast %16 : vector<8xf32> to vector<8x1xf32>
    %18 = arith.maximumf %15, %17 : vector<8x1xf32>
    %19 = arith.subf %15, %18 : vector<8x1xf32>
    %20 = math.exp %19 : vector<8x1xf32>
    %21 = vector.broadcast %18 : vector<8x1xf32> to vector<8x8xf32>
    %22 = arith.subf %12, %21 : vector<8x8xf32>
    %23 = math.exp %22 : vector<8x8xf32>
    %24 = arith.index_cast %c0_i32_1 : i32 to index
    %c0_13 = arith.constant 0 : index
    %c0_14 = arith.constant 0 : index
    %25 = vector.load %arg9[%24, %c0_13, %c0_14] : memref<2x8x1xf32, #tpu.memory_space<vmem>>, vector<1x8x1xf32>
    %26 = vector.shape_cast %25 : vector<1x8x1xf32> to vector<8x1xf32>
    %27 = arith.mulf %20, %26 : vector<8x1xf32>
    %cst_15 = arith.constant dense<0.000000e+00> : vector<8xf32>
    %28 = vector.multi_reduction <add>, %23, %cst_15 [1] : vector<8x8xf32> to vector<8xf32>
    %29 = vector.shape_cast %28 : vector<8xf32> to vector<8x1xf32>
    %30 = arith.addf %27, %29 : vector<8x1xf32>
    %31 = arith.index_cast %c0_i32_1 : i32 to index
    %c0_16 = arith.constant 0 : index
    %c0_17 = arith.constant 0 : index
    %32 = vector.load %arg9[%31, %c0_16, %c0_17] : memref<2x8x1xf32, #tpu.memory_space<vmem>>, vector<1x8x1xf32>
    %33 = vector.shape_cast %32 : vector<1x8x1xf32> to vector<8x1xf32>
    %34 = vector.shape_cast %30 : vector<8x1xf32> to vector<1x8x1xf32>
    tpu.vector_store %arg9[%31, %c0_16, %c0_17], %34 {strides = array<i32>} : memref<2x8x1xf32, #tpu.memory_space<vmem>>, vector<1x8x1xf32>,
    %35 = arith.index_cast %c0_i32_1 : i32 to index
    %c0_18 = arith.constant 0 : index
    %c0_19 = arith.constant 0 : index
    %36 = vector.load %arg10[%35, %c0_18, %c0_19] : memref<2x8x16xf32, #tpu.memory_space<vmem>>, vector<1x8x16xf32>
    %37 = vector.shape_cast %36 : vector<1x8x16xf32> to vector<8x16xf32>
    %38 = vector.broadcast %20 : vector<8x1xf32> to vector<8x16xf32>
    %39 = arith.mulf %38, %37 : vector<8x16xf32>
    %40 = arith.truncf %23 : vector<8x8xf32> to vector<8x8xbf16>
    %cst_20 = arith.constant dense<0.000000e+00> : vector<8x16xf32>
    %41 = tpu.matmul %40, %11, %cst_20 {dimension_numbers = #tpu.dot_dimension_numbers<[1], [0], [0], [1], [0, 0, 1, 1], [], []>} : vector<8x8xbf16>, vector<8x16xbf16>, vector<8x16xf32> -> vector<8x16xf32>
    %42 = arith.addf %39, %41 : vector<8x16xf32>
    %43 = arith.index_cast %c0_i32_1 : i32 to index
    %c0_21 = arith.constant 0 : index
    %c0_22 = arith.constant 0 : index
    %44 = vector.load %arg10[%43, %c0_21, %c0_22] : memref<2x8x16xf32, #tpu.memory_space<vmem>>, vector<1x8x16xf32>
    %45 = vector.shape_cast %44 : vector<1x8x16xf32> to vector<8x16xf32>
    %46 = vector.shape_cast %42 : vector<8x16xf32> to vector<1x8x16xf32>
    tpu.vector_store %arg10[%43, %c0_21, %c0_22], %46 {strides = array<i32>} : memref<2x8x16xf32, #tpu.memory_space<vmem>>, vector<1x8x16xf32>,
    %47 = arith.index_cast %c0_i32_1 : i32 to index
    %c0_23 = arith.constant 0 : index
    %c0_24 = arith.constant 0 : index
    %48 = vector.load %arg8[%47, %c0_23, %c0_24] : memref<2x8x1xf32, #tpu.memory_space<vmem>>, vector<1x8x1xf32>
    %49 = vector.shape_cast %48 : vector<1x8x1xf32> to vector<8x1xf32>
    %50 = vector.shape_cast %18 : vector<8x1xf32> to vector<1x8x1xf32>
    tpu.vector_store %arg8[%47, %c0_23, %c0_24], %50 {strides = array<i32>} : memref<2x8x1xf32, #tpu.memory_space<vmem>>, vector<1x8x1xf32>,
    %c1_i32 = arith.constant 1 : i32
    %c0_25 = arith.constant 0 : index
    %51 = arith.index_cast %c1_i32 : i32 to index
    %c0_26 = arith.constant 0 : index
    %c0_27 = arith.constant 0 : index
    %52 = vector.load %arg3[%c0_25, %51, %c0_26, %c0_27] : memref<1x2x8x8xbf16, #tpu.memory_space<vmem>>, vector<1x1x8x8xbf16>
    %53 = vector.shape_cast %52 : vector<1x1x8x8xbf16> to vector<8x8xbf16>
    %c0_28 = arith.constant 0 : index
    %54 = arith.index_cast %c1_i32 : i32 to index
    %c0_29 = arith.constant 0 : index
    %c0_30 = arith.constant 0 : index
    %55 = vector.load %arg4[%c0_28, %54, %c0_29, %c0_30] : memref<1x2x8x8xbf16, #tpu.memory_space<vmem>>, vector<1x1x8x8xbf16>
    %56 = vector.shape_cast %55 : vector<1x1x8x8xbf16> to vector<8x8xbf16>
    %c0_31 = arith.constant 0 : index
    %57 = arith.index_cast %c1_i32 : i32 to index
    %c0_32 = arith.constant 0 : index
    %c0_33 = arith.constant 0 : index
    %58 = vector.load %arg5[%c0_31, %57, %c0_32, %c0_33] : memref<1x2x8x16xbf16, #tpu.memory_space<vmem>>, vector<1x1x8x16xbf16>
    %59 = vector.shape_cast %58 : vector<1x1x8x16xbf16> to vector<8x16xbf16>
    %cst_34 = arith.constant dense<0.000000e+00> : vector<8x8xf32>
    %60 = tpu.matmul %53, %56, %cst_34 {dimension_numbers = #tpu.dot_dimension_numbers<[1], [1], [0], [0], [0, 0, 1, 0], [], []>} : vector<8x8xbf16>, vector<8x8xbf16>, vector<8x8xf32> -> vector<8x8xf32>
    %61 = arith.index_cast %c1_i32 : i32 to index
    %c0_35 = arith.constant 0 : index
    %c0_36 = arith.constant 0 : index
    %62 = vector.load %arg8[%61, %c0_35, %c0_36] : memref<2x8x1xf32, #tpu.memory_space<vmem>>, vector<1x8x1xf32>
    %63 = vector.shape_cast %62 : vector<1x8x1xf32> to vector<8x1xf32>
    %cst_37 = arith.constant dense<0xFF800000> : vector<8xf32>
    %64 = vector.multi_reduction <maximumf>, %60, %cst_37 [1] : vector<8x8xf32> to vector<8xf32>
    %65 = vector.shape_cast %64 : vector<8xf32> to vector<8x1xf32>
    %66 = arith.maximumf %63, %65 : vector<8x1xf32>
    %67 = arith.subf %63, %66 : vector<8x1xf32>
    %68 = math.exp %67 : vector<8x1xf32>
    %69 = vector.broadcast %66 : vector<8x1xf32> to vector<8x8xf32>
    %70 = arith.subf %60, %69 : vector<8x8xf32>
    %71 = math.exp %70 : vector<8x8xf32>
    %72 = arith.index_cast %c1_i32 : i32 to index
    %c0_38 = arith.constant 0 : index
    %c0_39 = arith.constant 0 : index
    %73 = vector.load %arg9[%72, %c0_38, %c0_39] : memref<2x8x1xf32, #tpu.memory_space<vmem>>, vector<1x8x1xf32>
    %74 = vector.shape_cast %73 : vector<1x8x1xf32> to vector<8x1xf32>
    %75 = arith.mulf %68, %74 : vector<8x1xf32>
    %cst_40 = arith.constant dense<0.000000e+00> : vector<8xf32>
    %76 = vector.multi_reduction <add>, %71, %cst_40 [1] : vector<8x8xf32> to vector<8xf32>
    %77 = vector.shape_cast %76 : vector<8xf32> to vector<8x1xf32>
    %78 = arith.addf %75, %77 : vector<8x1xf32>
    %79 = arith.index_cast %c1_i32 : i32 to index
    %c0_41 = arith.constant 0 : index
    %c0_42 = arith.constant 0 : index
    %80 = vector.load %arg9[%79, %c0_41, %c0_42] : memref<2x8x1xf32, #tpu.memory_space<vmem>>, vector<1x8x1xf32>
    %81 = vector.shape_cast %80 : vector<1x8x1xf32> to vector<8x1xf32>
    %82 = vector.shape_cast %78 : vector<8x1xf32> to vector<1x8x1xf32>
    tpu.vector_store %arg9[%79, %c0_41, %c0_42], %82 {strides = array<i32>} : memref<2x8x1xf32, #tpu.memory_space<vmem>>, vector<1x8x1xf32>,
    %83 = arith.index_cast %c1_i32 : i32 to index
    %c0_43 = arith.constant 0 : index
    %c0_44 = arith.constant 0 : index
    %84 = vector.load %arg10[%83, %c0_43, %c0_44] : memref<2x8x16xf32, #tpu.memory_space<vmem>>, vector<1x8x16xf32>
    %85 = vector.shape_cast %84 : vector<1x8x16xf32> to vector<8x16xf32>
    %86 = vector.broadcast %68 : vector<8x1xf32> to vector<8x16xf32>
    %87 = arith.mulf %86, %85 : vector<8x16xf32>
    %88 = arith.truncf %71 : vector<8x8xf32> to vector<8x8xbf16>
    %cst_45 = arith.constant dense<0.000000e+00> : vector<8x16xf32>
    %89 = tpu.matmul %88, %59, %cst_45 {dimension_numbers = #tpu.dot_dimension_numbers<[1], [0], [0], [1], [0, 0, 1, 1], [], []>} : vector<8x8xbf16>, vector<8x16xbf16>, vector<8x16xf32> -> vector<8x16xf32>
    %90 = arith.addf %87, %89 : vector<8x16xf32>
    %91 = arith.index_cast %c1_i32 : i32 to index
    %c0_46 = arith.constant 0 : index
    %c0_47 = arith.constant 0 : index
    %92 = vector.load %arg10[%91, %c0_46, %c0_47] : memref<2x8x16xf32, #tpu.memory_space<vmem>>, vector<1x8x16xf32>
    %93 = vector.shape_cast %92 : vector<1x8x16xf32> to vector<8x16xf32>
    %94 = vector.shape_cast %90 : vector<8x16xf32> to vector<1x8x16xf32>
    tpu.vector_store %arg10[%91, %c0_46, %c0_47], %94 {strides = array<i32>} : memref<2x8x16xf32, #tpu.memory_space<vmem>>, vector<1x8x16xf32>,
    %95 = arith.index_cast %c1_i32 : i32 to index
    %c0_48 = arith.constant 0 : index
    %c0_49 = arith.constant 0 : index
    %96 = vector.load %arg8[%95, %c0_48, %c0_49] : memref<2x8x1xf32, #tpu.memory_space<vmem>>, vector<1x8x1xf32>
    %97 = vector.shape_cast %96 : vector<1x8x1xf32> to vector<8x1xf32>
    %98 = vector.shape_cast %66 : vector<8x1xf32> to vector<1x8x1xf32>
    tpu.vector_store %arg8[%95, %c0_48, %c0_49], %98 {strides = array<i32>} : memref<2x8x1xf32, #tpu.memory_space<vmem>>, vector<1x8x1xf32>,
    %c2_i32 = arith.constant 2 : i32
    %c1_i32_50 = arith.constant 1 : i32
    %99 = arith.cmpi eq, %arg2, %c1_i32_50 : i32
    %100 = arith.extui %99 : i1 to i32
    %c0_i32_51 = arith.constant 0 : i32
    %101 = arith.cmpi ne, %100, %c0_i32_51 : i32
    scf.if %101 {
      %cst_52 = arith.constant 0.000000e+00 : f32
      %102 = vector.broadcast %cst_52 : f32 to vector<8x32xf32>
      %c0_i32_53 = arith.constant 0 : i32
      %103 = arith.index_cast %c0_i32_53 : i32 to index
      %c0_54 = arith.constant 0 : index
      %c0_55 = arith.constant 0 : index
      %104 = vector.load %arg10[%103, %c0_54, %c0_55] : memref<2x8x16xf32, #tpu.memory_space<vmem>>, vector<1x8x16xf32>
      %105 = vector.shape_cast %104 : vector<1x8x16xf32> to vector<8x16xf32>
      %106 = arith.index_cast %c0_i32_53 : i32 to index
      %c0_56 = arith.constant 0 : index
      %c0_57 = arith.constant 0 : index
      %107 = vector.load %arg9[%106, %c0_56, %c0_57] : memref<2x8x1xf32, #tpu.memory_space<vmem>>, vector<1x8x1xf32>
      %108 = vector.shape_cast %107 : vector<1x8x1xf32> to vector<8x1xf32>
      %109 = tpu.reciprocal %108 {approx = true} : vector<8x1xf32> -> vector<8x1xf32>
      %110 = vector.broadcast %109 : vector<8x1xf32> to vector<8x16xf32>
      %111 = arith.mulf %105, %110 : vector<8x16xf32>
      %112 = arith.truncf %111 : vector<8x16xf32> to vector<8x16xbf16>
      %113 = arith.index_cast %c0_i32_53 : i32 to index
      %c0_58 = arith.constant 0 : index
      %c0_59 = arith.constant 0 : index
      %114 = vector.load %arg6[%113, %c0_58, %c0_59] : memref<2x16x32xbf16, #tpu.memory_space<vmem>>, vector<1x16x32xbf16>
      %115 = vector.shape_cast %114 : vector<1x16x32xbf16> to vector<16x32xbf16>
      %cst_60 = arith.constant dense<0.000000e+00> : vector<8x32xf32>
      %116 = tpu.matmul %112, %115, %cst_60 {dimension_numbers = #tpu.dot_dimension_numbers<[1], [0], [0], [1], [0, 0, 1, 1], [], []>} : vector<8x16xbf16>, vector<16x32xbf16>, vector<8x32xf32> -> vector<8x32xf32>
      %117 = arith.addf %102, %116 : vector<8x32xf32>
      %c1_i32_61 = arith.constant 1 : i32
      %118 = arith.index_cast %c1_i32_61 : i32 to index
      %c0_62 = arith.constant 0 : index
      %c0_63 = arith.constant 0 : index
      %119 = vector.load %arg10[%118, %c0_62, %c0_63] : memref<2x8x16xf32, #tpu.memory_space<vmem>>, vector<1x8x16xf32>
      %120 = vector.shape_cast %119 : vector<1x8x16xf32> to vector<8x16xf32>
      %121 = arith.index_cast %c1_i32_61 : i32 to index
      %c0_64 = arith.constant 0 : index
      %c0_65 = arith.constant 0 : index
      %122 = vector.load %arg9[%121, %c0_64, %c0_65] : memref<2x8x1xf32, #tpu.memory_space<vmem>>, vector<1x8x1xf32>
      %123 = vector.shape_cast %122 : vector<1x8x1xf32> to vector<8x1xf32>
      %124 = tpu.reciprocal %123 {approx = true} : vector<8x1xf32> -> vector<8x1xf32>
      %125 = vector.broadcast %124 : vector<8x1xf32> to vector<8x16xf32>
      %126 = arith.mulf %120, %125 : vector<8x16xf32>
      %127 = arith.truncf %126 : vector<8x16xf32> to vector<8x16xbf16>
      %128 = arith.index_cast %c1_i32_61 : i32 to index
      %c0_66 = arith.constant 0 : index
      %c0_67 = arith.constant 0 : index
      %129 = vector.load %arg6[%128, %c0_66, %c0_67] : memref<2x16x32xbf16, #tpu.memory_space<vmem>>, vector<1x16x32xbf16>
      %130 = vector.shape_cast %129 : vector<1x16x32xbf16> to vector<16x32xbf16>
      %cst_68 = arith.constant dense<0.000000e+00> : vector<8x32xf32>
      %131 = tpu.matmul %127, %130, %cst_68 {dimension_numbers = #tpu.dot_dimension_numbers<[1], [0], [0], [1], [0, 0, 1, 1], [], []>} : vector<8x16xbf16>, vector<16x32xbf16>, vector<8x32xf32> -> vector<8x32xf32>
      %132 = arith.addf %117, %131 : vector<8x32xf32>
      %c2_i32_69 = arith.constant 2 : i32
      %c0_70 = arith.constant 0 : index
      %c0_71 = arith.constant 0 : index
      %c0_72 = arith.constant 0 : index
      %133 = vector.load %arg7[%c0_70, %c0_71, %c0_72] : memref<1x8x32xf32, #tpu.memory_space<vmem>>, vector<1x8x32xf32>
      %134 = vector.shape_cast %133 : vector<1x8x32xf32> to vector<8x32xf32>
      %135 = vector.shape_cast %132 : vector<8x32xf32> to vector<1x8x32xf32>
      tpu.vector_store %arg7[%c0_70, %c0_71, %c0_72], %135 {strides = array<i32>} : memref<1x8x32xf32, #tpu.memory_space<vmem>>, vector<1x8x32xf32>,
    } else {
    }
    return
  }
  func.func @transform_0(%arg0: i32, %arg1: i32, %arg2: i32) -> (i32, i32, i32, i32) {
    %c0_i32 = arith.constant 0 : i32
    %c0_i32_0 = arith.constant 0 : i32
    %c0_i32_1 = arith.constant 0 : i32
    return %arg0, %c0_i32, %arg1, %c0_i32_0 : i32, i32, i32, i32
  }
  func.func @transform_1(%arg0: i32, %arg1: i32, %arg2: i32) -> (i32, i32, i32, i32) {
    %c0_i32 = arith.constant 0 : i32
    %c0_i32_0 = arith.constant 0 : i32
    %c0_i32_1 = arith.constant 0 : i32
    return %arg0, %c0_i32, %arg2, %c0_i32_0 : i32, i32, i32, i32
  }
  func.func @transform_2(%arg0: i32, %arg1: i32, %arg2: i32) -> (i32, i32, i32, i32) {
    %c0_i32 = arith.constant 0 : i32
    %c0_i32_0 = arith.constant 0 : i32
    %c0_i32_1 = arith.constant 0 : i32
    return %arg0, %c0_i32, %arg2, %c0_i32_0 : i32, i32, i32, i32
  }
  func.func @transform_3(%arg0: i32, %arg1: i32, %arg2: i32) -> (i32, i32, i32) {
    %c0_i32 = arith.constant 0 : i32
    %c0_i32_0 = arith.constant 0 : i32
    %c0_i32_1 = arith.constant 0 : i32
    %c0_i32_2 = arith.constant 0 : i32
    return %c0_i32, %c0_i32_0, %c0_i32_1 : i32, i32, i32
  }
  func.func @transform_4(%arg0: i32, %arg1: i32, %arg2: i32) -> (i32, i32, i32) {
    %c0_i32 = arith.constant 0 : i32
    %c0_i32_0 = arith.constant 0 : i32
    return %arg0, %arg1, %c0_i32 : i32, i32, i32
  }
}

</mosaic_0001>

<llo_original>
// kernel: tpu_custom_call.1
$region0: #{tpu_custom_call.1}
  #allocation0 [shape = 'u32[]', space=smem, size = 0x4, offset = 0x4, fixed_abs, tag = 'smem constant byte address 0x4 - core index']
  #allocation1 [shape = 'u32[72,128]{1,0:T(1,128)}', space=vmem, size = 0x9000, scoped, tag = 'internal scratch']
  #allocation2 [shape = 'f32[2,8,1]{2,1,0:T(8,128)}', space=vmem, size = 0x2000, scoped, tag = 'scratch operand']
  #allocation3 [shape = 'f32[2,8,1]{2,1,0:T(8,128)}', space=vmem, size = 0x2000, scoped, tag = 'scratch operand']
  #allocation4 [shape = 'f32[2,8,16]{2,1,0:T(8,128)}', space=vmem, size = 0x2000, scoped, tag = 'scratch operand']
  %s0 = inlined_call_operand.vmem [shape: bf16[2,2,16,8], index: 0, kind: input, shape index: {}]
  %s1 = inlined_call_operand.vmem [shape: bf16[2,2,16,8], index: 1, kind: input, shape index: {}]
  %s2 = inlined_call_operand.vmem [shape: bf16[2,2,16,16], index: 2, kind: input, shape index: {}]
  %s3 = inlined_call_operand.vmem [shape: bf16[2,16,32], index: 3, kind: input, shape index: {}]
  %s4 = inlined_call_operand.hbm [shape: f32[2,16,32], index: 4, kind: output, shape index: {}]
  %s5 = sld [smem:[#allocation0]]
  $region180: #{tpu_custom_call.1} parent=0
    _
  %s7 = ssub.s32 1, %s5
  %s8 = scalar_select 0, %s7, %s5
  $region1: #{tpu_custom_call.1} parent=0
    #allocation5 [shape = 'u8[8192]{0}', space=vmem, size = 0x2000, scoped, tag = 'input window, operand 0']
    #allocation6 [shape = 'u8[8192]{0}', space=vmem, size = 0x2000, scoped, tag = 'input window, operand 1']
    #allocation7 [shape = 'u8[8192]{0}', space=vmem, size = 0x2000, scoped, tag = 'input window, operand 2']
    #allocation8 [shape = 'u8[8192]{0}', space=vmem, size = 0x2000, scoped, tag = 'output window, operand 0']
    #allocation9 [shape = 's32[2]{0}', space=sflag, size = 0x8, scoped, tag = 'scoped memory for tpu_custom_call.1']
    %9 = vsyncpa [#allocation9], 0
    %s10 = scalar_lea.sflag [#allocation9], 1
    %11 = vsyncpa %s10, 0
    loop: start=0, step=1, limit=10
    $region2: #{tpu_custom_call.1} parent=1 // loop_pre_header
      _
    $region3: #{tpu_custom_call.1} parent=1 // loop_header
      %s13 = sphi 0, %s17
      %p14 = scmp.ge.s32.totalorder %s13, 10
      %s20 = sphi 0, %s39
      %s21 = sphi 0, %s35
      %s22 = sphi 0, %s31
      %s23 = sphi 0, %s20
      %s24 = sphi 0, %s21
      %s25 = sphi 0, %s22
      %s26 = sphi 0, %s23
      %s27 = sphi 0, %s24
      %s28 = sphi 0, %s25
      %s44 = sphi 0, %s46
      %s47 = sphi 0, %s44
      %s48 = sphi 0, %s47
      %s64 = sphi 0, %s48
      %s72 = sphi 0, %s74
      %s75 = sphi 0, %s72
      %s76 = sphi 0, %s75
      %s92 = sphi 0, %s76
      %s100 = sphi 0, %s102
      %s103 = sphi 0, %s100
      %s104 = sphi 0, %s103
      %s120 = sphi 0, %s104
      %s124 = sphi 0, %s124
      %s126 = sphi 0, %s124
      %s127 = sphi 0, %s126
      %s141 = sphi 0, %s127
      %s149 = sphi 0, %s151
      %s152 = sphi 0, %s149
      %s153 = sphi 0, %s152
      %s169 = sphi 0, %s153
    $region4: #{tpu_custom_call.1} parent=1 // loop_header_branch
      %16 = sbr.rel (%p14) target = $region8
    $region5: #{tpu_custom_call.1} parent=1 // loop_body
      %s18 = ssub.s32 %s13, 1
      %s19 = ssub.s32 %s13, 2
      %s29 = sadd.s32 1, %s22
      %p30 = scmp.ge.s32.totalorder %s29, 2
      %s31 = scalar_select %p30, 0, %s29
      %s32 = sadd.s32 1, %s21
      %s33 = scalar_select %p30, %s32, %s21
      %p34 = scmp.ge.s32.totalorder %s33, 2
      %s35 = scalar_select %p34, 0, %s33
      %s36 = sadd.s32 1, %s20
      %s37 = scalar_select %p34, %s36, %s20
      %p38 = scmp.ge.s32.totalorder %s37, 2
      %s39 = scalar_select %p38, 0, %s37
      %s40 = ssub.s32 %s20, %s39
      %s41 = ssub.s32 %s21, %s35
      %s42 = sor.u32 %s40, %s41
      %p43 = scmp.eq.s32.totalorder %s42, 0
      %s45 = sadd.s32 %s44, 1
      %s46 = scalar_select %p43, %s44, %s45
      %p49 = pneg %p43
      %p50 = scmp.eq.s32.totalorder %s13, 7
      %p51 = por %p49, %p50
      %p52 = scmp.ne.s32.totalorder %s44, %s47
      %p53 = scmp.eq.s32.totalorder %s13, 0
      %p54 = por %p52, %p53
      %p55 = scmp.ne.s32.totalorder %s44, %s47
      %p56 = scmp.eq.s32.totalorder %s18, 7
      %p57 = por %p55, %p56
      %p58 = scmp.ne.s32.totalorder %s47, %s48
      %p59 = scmp.eq.s32.totalorder %s18, 0
      %p60 = por %p58, %p59
      %p61 = scmp.ne.s32.totalorder %s47, %s48
      %p62 = scmp.eq.s32.totalorder %s19, 7
      %p63 = por %p61, %p62
      %p65 = scmp.ne.s32.totalorder %s48, %s64
      %p66 = scmp.eq.s32.totalorder %s19, 0
      %p67 = por %p65, %p66
      %s68 = ssub.s32 %s20, %s39
      %s69 = ssub.s32 %s22, %s31
      %s70 = sor.u32 %s68, %s69
      %p71 = scmp.eq.s32.totalorder %s70, 0
      %s73 = sadd.s32 %s72, 1
      %s74 = scalar_select %p71, %s72, %s73
      %p77 = pneg %p71
      %p78 = scmp.eq.s32.totalorder %s13, 7
      %p79 = por %p77, %p78
      %p80 = scmp.ne.s32.totalorder %s72, %s75
      %p81 = scmp.eq.s32.totalorder %s13, 0
      %p82 = por %p80, %p81
      %p83 = scmp.ne.s32.totalorder %s72, %s75
      %p84 = scmp.eq.s32.totalorder %s18, 7
      %p85 = por %p83, %p84
      %p86 = scmp.ne.s32.totalorder %s75, %s76
      %p87 = scmp.eq.s32.totalorder %s18, 0
      %p88 = por %p86, %p87
      %p89 = scmp.ne.s32.totalorder %s75, %s76
      %p90 = scmp.eq.s32.totalorder %s19, 7
      %p91 = por %p89, %p90
      %p93 = scmp.ne.s32.totalorder %s76, %s92
      %p94 = scmp.eq.s32.totalorder %s19, 0
      %p95 = por %p93, %p94
      %s96 = ssub.s32 %s20, %s39
      %s97 = ssub.s32 %s22, %s31
      %s98 = sor.u32 %s96, %s97
      %p99 = scmp.eq.s32.totalorder %s98, 0
      %s101 = sadd.s32 %s100, 1
      %s102 = scalar_select %p99, %s100, %s101
      %p105 = pneg %p99
      %p106 = scmp.eq.s32.totalorder %s13, 7
      %p107 = por %p105, %p106
      %p108 = scmp.ne.s32.totalorder %s100, %s103
      %p109 = scmp.eq.s32.totalorder %s13, 0
      %p110 = por %p108, %p109
      %p111 = scmp.ne.s32.totalorder %s100, %s103
      %p112 = scmp.eq.s32.totalorder %s18, 7
      %p113 = por %p111, %p112
      %p114 = scmp.ne.s32.totalorder %s103, %s104
      %p115 = scmp.eq.s32.totalorder %s18, 0
      %p116 = por %p114, %p115
      %p117 = scmp.ne.s32.totalorder %s103, %s104
      %p118 = scmp.eq.s32.totalorder %s19, 7
      %p119 = por %p117, %p118
      %p121 = scmp.ne.s32.totalorder %s104, %s120
      %p122 = scmp.eq.s32.totalorder %s19, 0
      %p123 = por %p121, %p122
      %s125 = sadd.s32 %s124, 1
      %p128 = scmp.eq.s32.totalorder %s13, 7
      %p129 = scmp.ne.s32.totalorder %s124, %s126
      %p130 = scmp.eq.s32.totalorder %s13, 0
      %p131 = por %p129, %p130
      %p132 = scmp.ne.s32.totalorder %s124, %s126
      %p133 = scmp.eq.s32.totalorder %s18, 7
      %p134 = por %p132, %p133
      %p135 = scmp.ne.s32.totalorder %s126, %s127
      %p136 = scmp.eq.s32.totalorder %s18, 0
      %p137 = por %p135, %p136
      %p138 = scmp.ne.s32.totalorder %s126, %s127
      %p139 = scmp.eq.s32.totalorder %s19, 7
      %p140 = por %p138, %p139
      %p142 = scmp.ne.s32.totalorder %s127, %s141
      %p143 = scmp.eq.s32.totalorder %s19, 0
      %p144 = por %p142, %p143
      %s145 = ssub.s32 %s20, %s39
      %s146 = ssub.s32 %s21, %s35
      %s147 = sor.u32 %s145, %s146
      %p148 = scmp.eq.s32.totalorder %s147, 0
      %s150 = sadd.s32 %s149, 1
      %s151 = scalar_select %p148, %s149, %s150
      %p154 = pneg %p148
      %p155 = scmp.eq.s32.totalorder %s13, 7
      %p156 = por %p154, %p155
      %p157 = scmp.ne.s32.totalorder %s149, %s152
      %p158 = scmp.eq.s32.totalorder %s13, 0
      %p159 = por %p157, %p158
      %p160 = scmp.ne.s32.totalorder %s149, %s152
      %p161 = scmp.eq.s32.totalorder %s18, 7
      %p162 = por %p160, %p161
      %p163 = scmp.ne.s32.totalorder %s152, %s153
      %p164 = scmp.eq.s32.totalorder %s18, 0
      %p165 = por %p163, %p164
      %p166 = scmp.ne.s32.totalorder %s152, %s153
      %p167 = scmp.eq.s32.totalorder %s19, 7
      %p168 = por %p166, %p167
      %p170 = scmp.ne.s32.totalorder %s153, %s169
      %p171 = scmp.eq.s32.totalorder %s19, 0
      %p172 = por %p170, %p171
      %p173 = scmp.le.s32.totalorder 1, %s13
      %p174 = scmp.lt.s32.totalorder %s13, 9
      %p175 = pnand %p173, %p174
      %p176 = pneg %p175
      // Predicated region
      $region9: #{tpu_custom_call.1} parent=5 // pred_check
        _
      $region10: #{tpu_custom_call.1} parent=5 // pred_check_branch
        %178 = sbr.rel (%p175) target = $region12
      $region11: #{tpu_custom_call.1} parent=5 // pred_region
        %s179 = ssub.s32 %s13, 1
        // Predicated region
        $region13: #{tpu_custom_call.1} parent=11 // pred_check
          %p180 = pneg %p137
        $region14: #{tpu_custom_call.1} parent=11 // pred_check_branch
          %182 = sbr.rel (%p180) target = $region16
        $region15: #{tpu_custom_call.1} parent=11 // pred_region
          _
        $region16: #{tpu_custom_call.1} parent=11 // pred_fallthru
          _
      $region12: #{tpu_custom_call.1} parent=5 // pred_fallthru
        _
      %p183 = scmp.lt.s32.totalorder %s13, 8
      // Predicated region
      $region17: #{tpu_custom_call.1} parent=5 // pred_check
        %p184 = pneg %p183
      $region18: #{tpu_custom_call.1} parent=5 // pred_check_branch
        %186 = sbr.rel (%p184) target = $region20
      $region19: #{tpu_custom_call.1} parent=5 // pred_region
        // Predicated region
        $region21: #{tpu_custom_call.1} parent=19 // pred_check
          %p187 = pneg %p54
        $region22: #{tpu_custom_call.1} parent=19 // pred_check_branch
          %189 = sbr.rel (%p187) target = $region24
        $region23: #{tpu_custom_call.1} parent=19 // pred_region
          %s190 = sand.u32 %s44, 1
          %s191 = sand.u32 %s44, 1
          %s192 = smul.addr %s191, 8
          %s193 = scalar_lea.vmem [#allocation5], %s192
          %s194 = smul.addr %s20, 4
          %s195 = sadd.s32 %s21, %s194
          %s196 = smul.addr %s195, 4
          %s197 = scalar_lea.vmem %s0, %s196
          // Predicated region
          $region25: #{tpu_custom_call.1} parent=23 // pred_check
            _
          $region26: #{tpu_custom_call.1} parent=23 // pred_check_branch
            %199 = sbr.rel (0) target = $region28
          $region27: #{tpu_custom_call.1} parent=23 // pred_region
            // Predicated region
            $region29: #{tpu_custom_call.1} parent=27 // pred_check
              _
            $region30: #{tpu_custom_call.1} parent=27 // pred_check_branch
              %201 = sbr.rel target = $region32
            $region31: #{tpu_custom_call.1} parent=27 // pred_region
              // Predicated region
              $region44: #{tpu_custom_call.1} parent=31 // pred_check
                _
              $region45: #{tpu_custom_call.1} parent=31 // pred_check_branch
                %219 = sbr.rel (0) target = $region47
              $region46: #{tpu_custom_call.1} parent=31 // pred_region
                loop: start=0, step=1, limit=1
                $region48: #{tpu_custom_call.1} parent=46 // loop_pre_header
                  _
                $region49: #{tpu_custom_call.1} parent=46 // loop_header
                  %s221 = sphi 0, %s225
                  %p222 = scmp.ge.s32.totalorder %s221, 1
                  %s226 = sphi %s197, %s197
                  %s227 = sphi %s193, %s193
                $region50: #{tpu_custom_call.1} parent=46 // loop_header_branch
                  %224 = sbr.rel (%p222) target = $region54
                $region51: #{tpu_custom_call.1} parent=46 // loop_body
                  _
                $region52: #{tpu_custom_call.1} parent=46 // loop_footer
                  %s225 = sadd.s32 1, %s221
                $region53: #{tpu_custom_call.1} parent=46 // loop_footer_branch
                  %220 = sbr.rel target = $region49
                $region54: #{tpu_custom_call.1} parent=46 // loop_exit
                  _
                %s229 = ssub.s32 16, 1
                loop: start=0, step=1, limit=1
                $region55: #{tpu_custom_call.1} parent=46 // loop_pre_header
                  _
                $region56: #{tpu_custom_call.1} parent=46 // loop_header
                  %s231 = sphi 0, %s235
                  %p232 = scmp.ge.s32.totalorder %s231, 1
                  %s236 = sphi %s197, %s197
                  %s237 = sphi %s193, %s193
                $region57: #{tpu_custom_call.1} parent=46 // loop_header_branch
                  %234 = sbr.rel (%p232) target = $region61
                $region58: #{tpu_custom_call.1} parent=46 // loop_body
                  %v238 = vld [vmem:[%s236] sm:%s229]
                  %239 = vst [vmem:[%s237] sm:%s229] %v238
                  %v240 = vld [vmem:[%s236 + $0x8] sm:%s229]
                  %241 = vst [vmem:[%s237 + $0x4] sm:%s229] %v240
                $region59: #{tpu_custom_call.1} parent=46 // loop_footer
                  %s235 = sadd.s32 1, %s231
                $region60: #{tpu_custom_call.1} parent=46 // loop_footer_branch
                  %230 = sbr.rel target = $region56
                $region61: #{tpu_custom_call.1} parent=46 // loop_exit
                  _
              $region47: #{tpu_custom_call.1} parent=31 // pred_fallthru
                _
            $region32: #{tpu_custom_call.1} parent=27 // pred_fallthru
              _
            // Predicated region
            $region33: #{tpu_custom_call.1} parent=27 // pred_check
              _
            $region34: #{tpu_custom_call.1} parent=27 // pred_check_branch
              %203 = sbr.rel (0) target = $region36
            $region35: #{tpu_custom_call.1} parent=27 // pred_region
              %s205 = ssub.s32 16, 1
              loop: start=0, step=1, limit=1
              $region37: #{tpu_custom_call.1} parent=35 // loop_pre_header
                _
              $region38: #{tpu_custom_call.1} parent=35 // loop_header
                %s207 = sphi 0, %s211
                %p208 = scmp.ge.s32.totalorder %s207, 1
                %s212 = sphi %s197, %s197
                %s213 = sphi %s193, %s193
              $region39: #{tpu_custom_call.1} parent=35 // loop_header_branch
                %210 = sbr.rel (%p208) target = $region43
              $region40: #{tpu_custom_call.1} parent=35 // loop_body
                %v214 = vld [vmem:[%s212] sm:%s205]
                %215 = vst [vmem:[%s213] sm:%s205] %v214
                %v216 = vld [vmem:[%s212 + $0x8] sm:%s205]
                %217 = vst [vmem:[%s213 + $0x4] sm:%s205] %v216
              $region41: #{tpu_custom_call.1} parent=35 // loop_footer
                %s211 = sadd.s32 1, %s207
              $region42: #{tpu_custom_call.1} parent=35 // loop_footer_branch
                %206 = sbr.rel target = $region38
              $region43: #{tpu_custom_call.1} parent=35 // loop_exit
                _
            $region36: #{tpu_custom_call.1} parent=27 // pred_fallthru
              _
          $region28: #{tpu_custom_call.1} parent=23 // pred_fallthru
            _
          %242 = vnop
        $region24: #{tpu_custom_call.1} parent=19 // pred_fallthru
          _
        // Predicated region
        $region62: #{tpu_custom_call.1} parent=19 // pred_check
          %p243 = pneg %p82
        $region63: #{tpu_custom_call.1} parent=19 // pred_check_branch
          %245 = sbr.rel (%p243) target = $region65
        $region64: #{tpu_custom_call.1} parent=19 // pred_region
          %s246 = sand.u32 %s72, 1
          %s247 = sand.u32 %s72, 1
          %s248 = smul.addr %s247, 8
          %s249 = scalar_lea.vmem [#allocation6], %s248
          %s250 = smul.addr %s20, 4
          %s251 = sadd.s32 %s22, %s250
          %s252 = smul.addr %s251, 4
          %s253 = scalar_lea.vmem %s1, %s252
          // Predicated region
          $region66: #{tpu_custom_call.1} parent=64 // pred_check
            _
          $region67: #{tpu_custom_call.1} parent=64 // pred_check_branch
            %255 = sbr.rel (0) target = $region69
          $region68: #{tpu_custom_call.1} parent=64 // pred_region
            // Predicated region
            $region70: #{tpu_custom_call.1} parent=68 // pred_check
              _
            $region71: #{tpu_custom_call.1} parent=68 // pred_check_branch
              %257 = sbr.rel target = $region73
            $region72: #{tpu_custom_call.1} parent=68 // pred_region
              // Predicated region
              $region85: #{tpu_custom_call.1} parent=72 // pred_check
                _
              $region86: #{tpu_custom_call.1} parent=72 // pred_check_branch
                %275 = sbr.rel (0) target = $region88
              $region87: #{tpu_custom_call.1} parent=72 // pred_region
                loop: start=0, step=1, limit=1
                $region89: #{tpu_custom_call.1} parent=87 // loop_pre_header
                  _
                $region90: #{tpu_custom_call.1} parent=87 // loop_header
                  %s277 = sphi 0, %s281
                  %p278 = scmp.ge.s32.totalorder %s277, 1
                  %s282 = sphi %s253, %s253
                  %s283 = sphi %s249, %s249
                $region91: #{tpu_custom_call.1} parent=87 // loop_header_branch
                  %280 = sbr.rel (%p278) target = $region95
                $region92: #{tpu_custom_call.1} parent=87 // loop_body
                  _
                $region93: #{tpu_custom_call.1} parent=87 // loop_footer
                  %s281 = sadd.s32 1, %s277
                $region94: #{tpu_custom_call.1} parent=87 // loop_footer_branch
                  %276 = sbr.rel target = $region90
                $region95: #{tpu_custom_call.1} parent=87 // loop_exit
                  _
                %s285 = ssub.s32 16, 1
                loop: start=0, step=1, limit=1
                $region96: #{tpu_custom_call.1} parent=87 // loop_pre_header
                  _
                $region97: #{tpu_custom_call.1} parent=87 // loop_header
                  %s287 = sphi 0, %s291
                  %p288 = scmp.ge.s32.totalorder %s287, 1
                  %s292 = sphi %s253, %s253
                  %s293 = sphi %s249, %s249
                $region98: #{tpu_custom_call.1} parent=87 // loop_header_branch
                  %290 = sbr.rel (%p288) target = $region102
                $region99: #{tpu_custom_call.1} parent=87 // loop_body
                  %v294 = vld [vmem:[%s292] sm:%s285]
                  %295 = vst [vmem:[%s293] sm:%s285] %v294
                  %v296 = vld [vmem:[%s292 + $0x8] sm:%s285]
                  %297 = vst [vmem:[%s293 + $0x4] sm:%s285] %v296
                $region100: #{tpu_custom_call.1} parent=87 // loop_footer
                  %s291 = sadd.s32 1, %s287
                $region101: #{tpu_custom_call.1} parent=87 // loop_footer_branch
                  %286 = sbr.rel target = $region97
                $region102: #{tpu_custom_call.1} parent=87 // loop_exit
                  _
              $region88: #{tpu_custom_call.1} parent=72 // pred_fallthru
                _
            $region73: #{tpu_custom_call.1} parent=68 // pred_fallthru
              _
            // Predicated region
            $region74: #{tpu_custom_call.1} parent=68 // pred_check
              _
            $region75: #{tpu_custom_call.1} parent=68 // pred_check_branch
              %259 = sbr.rel (0) target = $region77
            $region76: #{tpu_custom_call.1} parent=68 // pred_region
              %s261 = ssub.s32 16, 1
              loop: start=0, step=1, limit=1
              $region78: #{tpu_custom_call.1} parent=76 // loop_pre_header
                _
              $region79: #{tpu_custom_call.1} parent=76 // loop_header
                %s263 = sphi 0, %s267
                %p264 = scmp.ge.s32.totalorder %s263, 1
                %s268 = sphi %s253, %s253
                %s269 = sphi %s249, %s249
              $region80: #{tpu_custom_call.1} parent=76 // loop_header_branch
                %266 = sbr.rel (%p264) target = $region84
              $region81: #{tpu_custom_call.1} parent=76 // loop_body
                %v270 = vld [vmem:[%s268] sm:%s261]
                %271 = vst [vmem:[%s269] sm:%s261] %v270
                %v272 = vld [vmem:[%s268 + $0x8] sm:%s261]
                %273 = vst [vmem:[%s269 + $0x4] sm:%s261] %v272
              $region82: #{tpu_custom_call.1} parent=76 // loop_footer
                %s267 = sadd.s32 1, %s263
              $region83: #{tpu_custom_call.1} parent=76 // loop_footer_branch
                %262 = sbr.rel target = $region79
              $region84: #{tpu_custom_call.1} parent=76 // loop_exit
                _
            $region77: #{tpu_custom_call.1} parent=68 // pred_fallthru
              _
          $region69: #{tpu_custom_call.1} parent=64 // pred_fallthru
            _
          %298 = vnop
        $region65: #{tpu_custom_call.1} parent=19 // pred_fallthru
          _
        // Predicated region
        $region103: #{tpu_custom_call.1} parent=19 // pred_check
          %p299 = pneg %p110
        $region104: #{tpu_custom_call.1} parent=19 // pred_check_branch
          %301 = sbr.rel (%p299) target = $region106
        $region105: #{tpu_custom_call.1} parent=19 // pred_region
          %s302 = sand.u32 %s100, 1
          %s303 = sand.u32 %s100, 1
          %s304 = smul.addr %s303, 8
          %s305 = scalar_lea.vmem [#allocation7], %s304
          %s306 = smul.addr %s20, 4
          %s307 = sadd.s32 %s22, %s306
          %s308 = smul.addr %s307, 4
          %s309 = scalar_lea.vmem %s2, %s308
          // Predicated region
          $region107: #{tpu_custom_call.1} parent=105 // pred_check
            _
          $region108: #{tpu_custom_call.1} parent=105 // pred_check_branch
            %311 = sbr.rel (0) target = $region110
          $region109: #{tpu_custom_call.1} parent=105 // pred_region
            // Predicated region
            $region111: #{tpu_custom_call.1} parent=109 // pred_check
              _
            $region112: #{tpu_custom_call.1} parent=109 // pred_check_branch
              %313 = sbr.rel target = $region114
            $region113: #{tpu_custom_call.1} parent=109 // pred_region
              // Predicated region
              $region126: #{tpu_custom_call.1} parent=113 // pred_check
                _
              $region127: #{tpu_custom_call.1} parent=113 // pred_check_branch
                %331 = sbr.rel (0) target = $region129
              $region128: #{tpu_custom_call.1} parent=113 // pred_region
                loop: start=0, step=1, limit=1
                $region130: #{tpu_custom_call.1} parent=128 // loop_pre_header
                  _
                $region131: #{tpu_custom_call.1} parent=128 // loop_header
                  %s333 = sphi 0, %s337
                  %p334 = scmp.ge.s32.totalorder %s333, 1
                  %s338 = sphi %s309, %s309
                  %s339 = sphi %s305, %s305
                $region132: #{tpu_custom_call.1} parent=128 // loop_header_branch
                  %336 = sbr.rel (%p334) target = $region136
                $region133: #{tpu_custom_call.1} parent=128 // loop_body
                  _
                $region134: #{tpu_custom_call.1} parent=128 // loop_footer
                  %s337 = sadd.s32 1, %s333
                $region135: #{tpu_custom_call.1} parent=128 // loop_footer_branch
                  %332 = sbr.rel target = $region131
                $region136: #{tpu_custom_call.1} parent=128 // loop_exit
                  _
                %s341 = ssub.s32 16, 1
                loop: start=0, step=1, limit=1
                $region137: #{tpu_custom_call.1} parent=128 // loop_pre_header
                  _
                $region138: #{tpu_custom_call.1} parent=128 // loop_header
                  %s343 = sphi 0, %s347
                  %p344 = scmp.ge.s32.totalorder %s343, 1
                  %s348 = sphi %s309, %s309
                  %s349 = sphi %s305, %s305
                $region139: #{tpu_custom_call.1} parent=128 // loop_header_branch
                  %346 = sbr.rel (%p344) target = $region143
                $region140: #{tpu_custom_call.1} parent=128 // loop_body
                  %v350 = vld [vmem:[%s348] sm:%s341]
                  %351 = vst [vmem:[%s349] sm:%s341] %v350
                  %v352 = vld [vmem:[%s348 + $0x8] sm:%s341]
                  %353 = vst [vmem:[%s349 + $0x4] sm:%s341] %v352
                $region141: #{tpu_custom_call.1} parent=128 // loop_footer
                  %s347 = sadd.s32 1, %s343
                $region142: #{tpu_custom_call.1} parent=128 // loop_footer_branch
                  %342 = sbr.rel target = $region138
                $region143: #{tpu_custom_call.1} parent=128 // loop_exit
                  _
              $region129: #{tpu_custom_call.1} parent=113 // pred_fallthru
                _
            $region114: #{tpu_custom_call.1} parent=109 // pred_fallthru
              _
            // Predicated region
            $region115: #{tpu_custom_call.1} parent=109 // pred_check
              _
            $region116: #{tpu_custom_call.1} parent=109 // pred_check_branch
              %315 = sbr.rel (0) target = $region118
            $region117: #{tpu_custom_call.1} parent=109 // pred_region
              %s317 = ssub.s32 16, 1
              loop: start=0, step=1, limit=1
              $region119: #{tpu_custom_call.1} parent=117 // loop_pre_header
                _
              $region120: #{tpu_custom_call.1} parent=117 // loop_header
                %s319 = sphi 0, %s323
                %p320 = scmp.ge.s32.totalorder %s319, 1
                %s324 = sphi %s309, %s309
                %s325 = sphi %s305, %s305
              $region121: #{tpu_custom_call.1} parent=117 // loop_header_branch
                %322 = sbr.rel (%p320) target = $region125
              $region122: #{tpu_custom_call.1} parent=117 // loop_body
                %v326 = vld [vmem:[%s324] sm:%s317]
                %327 = vst [vmem:[%s325] sm:%s317] %v326
                %v328 = vld [vmem:[%s324 + $0x8] sm:%s317]
                %329 = vst [vmem:[%s325 + $0x4] sm:%s317] %v328
              $region123: #{tpu_custom_call.1} parent=117 // loop_footer
                %s323 = sadd.s32 1, %s319
              $region124: #{tpu_custom_call.1} parent=117 // loop_footer_branch
                %318 = sbr.rel target = $region120
              $region125: #{tpu_custom_call.1} parent=117 // loop_exit
                _
            $region118: #{tpu_custom_call.1} parent=109 // pred_fallthru
              _
          $region110: #{tpu_custom_call.1} parent=105 // pred_fallthru
            _
          %354 = vnop
        $region106: #{tpu_custom_call.1} parent=19 // pred_fallthru
          _
      $region20: #{tpu_custom_call.1} parent=5 // pred_fallthru
        _
      %p355 = scmp.le.s32.totalorder 1, %s13
      %p356 = scmp.lt.s32.totalorder %s13, 9
      %p357 = pnand %p355, %p356
      %p358 = pneg %p357
      // Predicated region
      $region144: #{tpu_custom_call.1} parent=5 // pred_check
        _
      $region145: #{tpu_custom_call.1} parent=5 // pred_check_branch
        %360 = sbr.rel (%p357) target = $region147
      $region146: #{tpu_custom_call.1} parent=5 // pred_region
        %s361 = ssub.s32 %s13, 1
        %s362 = sand.u32 %s47, 1
        %s363 = sand.u32 %s47, 1
        %s364 = smul.addr %s363, 8
        %s365 = scalar_lea.vmem [#allocation5], %s364
        // Predicated region
        $region148: #{tpu_custom_call.1} parent=146 // pred_check
          %p366 = pneg %p60
        $region149: #{tpu_custom_call.1} parent=146 // pred_check_branch
          %368 = sbr.rel (%p366) target = $region151
        $region150: #{tpu_custom_call.1} parent=146 // pred_region
          _
        $region151: #{tpu_custom_call.1} parent=146 // pred_fallthru
          _
        %s369 = sand.u32 %s75, 1
        %s370 = sand.u32 %s75, 1
        %s371 = smul.addr %s370, 8
        %s372 = scalar_lea.vmem [#allocation6], %s371
        // Predicated region
        $region152: #{tpu_custom_call.1} parent=146 // pred_check
          %p373 = pneg %p88
        $region153: #{tpu_custom_call.1} parent=146 // pred_check_branch
          %375 = sbr.rel (%p373) target = $region155
        $region154: #{tpu_custom_call.1} parent=146 // pred_region
          _
        $region155: #{tpu_custom_call.1} parent=146 // pred_fallthru
          _
        %s376 = sand.u32 %s103, 1
        %s377 = sand.u32 %s103, 1
        %s378 = smul.addr %s377, 8
        %s379 = scalar_lea.vmem [#allocation7], %s378
        // Predicated region
        $region156: #{tpu_custom_call.1} parent=146 // pred_check
          %p380 = pneg %p116
        $region157: #{tpu_custom_call.1} parent=146 // pred_check_branch
          %382 = sbr.rel (%p380) target = $region159
        $region158: #{tpu_custom_call.1} parent=146 // pred_region
          _
        $region159: #{tpu_custom_call.1} parent=146 // pred_fallthru
          _
        %s383 = sand.u32 %s47, 1
        %s384 = sand.u32 %s47, 1
        %s385 = smul.addr %s384, 8
        %s386 = scalar_lea.vmem [#allocation5], %s385
        %p387 = pneg %p60
        %p388 = pneg %p57
        %s389 = sand.u32 %s75, 1
        %s390 = sand.u32 %s75, 1
        %s391 = smul.addr %s390, 8
        %s392 = scalar_lea.vmem [#allocation6], %s391
        %p393 = pneg %p88
        %p394 = pneg %p85
        %s395 = sand.u32 %s103, 1
        %s396 = sand.u32 %s103, 1
        %s397 = smul.addr %s396, 8
        %s398 = scalar_lea.vmem [#allocation7], %s397
        %p399 = pneg %p116
        %p400 = pneg %p113
        %p401 = pneg %p137
        %p402 = pneg %p134
        %p403 = pneg %p165
        %p404 = pneg %p162
        %s405 = sand.u32 %s152, 1
        %s406 = scalar_lea.sflag [#allocation9], %s405
        %s407 = sand.u32 %s152, 1
        %s408 = smul.addr %s407, 8
        %s409 = scalar_lea.vmem [#allocation8], %s408
        %p411 = scmp.eq.s32.totalorder %s25, 0
        // Predicated region
        $region160: #{tpu_custom_call.1} parent=146 // pred_check
          %p412 = pneg %p411
        $region161: #{tpu_custom_call.1} parent=146 // pred_check_branch
          %414 = sbr.rel (%p412) target = $region163
        $region162: #{tpu_custom_call.1} parent=146 // pred_region
          %vm415 = vcmask 7168
          %416 = vst.msk [vmem:[#allocation2] sm:$0xff] %vm415, -inf
          %417 = vst.msk [vmem:[#allocation2 + $0x8] sm:$0xff] %vm415, -inf
          %418 = vst.msk [vmem:[#allocation3] sm:$0xff] %vm415, 0.0
          %419 = vst.msk [vmem:[#allocation3 + $0x8] sm:$0xff] %vm415, 0.0
          %vm420 = vcmask 130048
          %421 = vst.msk [vmem:[#allocation4] sm:$0xff] %vm420, 0.0
          %422 = vst.msk [vmem:[#allocation4 + $0x8] sm:$0xff] %vm420, 0.0
        $region163: #{tpu_custom_call.1} parent=146 // pred_fallthru
          _
        %v423 = vld [vmem:[%s365] sm:$0xf]
        %v424 = vld [vmem:[%s372] sm:$0xf]
        %v425 = vld [vmem:[%s379] sm:$0xf]
        %vm426 = vcmask 64512
        %v428 = vsel %vm426, %v423, 0
        %v431 = vsel %vm426, %v424, 0
        %433 = vmatpush.bf16.xpose.msra.mxu0 0
        %434 = vmatpush.bf16.xpose.msra.mxu0 0
        %435 = vmatpush.bf16.xpose.msra.mxu0 0
        %436 = vmatpush.bf16.xpose.msra.mxu0 0
        %437 = vmatpush.bf16.xpose.msra.mxu0 0
        %438 = vmatpush.bf16.xpose.msra.mxu0 0
        %439 = vmatpush.bf16.xpose.msra.mxu0 0
        %440 = vmatpush.bf16.xpose.msra.mxu0 %v431
        %441 = vmatmul.bf16.gmra.mxu0 %v428
        %v442 = vpop.f32.mrf.mxu0
        %v443 = vadd.f32 0.0, %v442
        %v444 = vpop.f32.mrf.mxu0
        %445 = vdwg.mxu0
        %v446 = vld [vmem:[#allocation2] sm:$0xff]
        %v447 = vsel %vm426, %v443, -inf
        %448 = vmax.xlane.f32.xlu0 %v447
        %v449 = vpop.xlane.xlu0 %448
        %v450 = vmax.f32 %v446, %v449
        %v451 = vsub.f32 %v446, %v450
        %v452 = vmul.f32 %v451, 1.442695
        %v453 = vpow.pop %v452
        %455 = vset.pattern.permute.xlu0 0
        %456 = vperm.xlu0 %455, %v450
        %v457 = vpop.permute.xlu0 %456
        %v459 = vsub.f32 %v443, %v457
        %v460 = vmul.f32 %v459, 1.442695
        %v461 = vpow.pop %v460
        %v462 = vld [vmem:[#allocation3] sm:$0xff]
        %v463 = vmul.f32 %v453, %v462
        %v464 = vsel %vm426, %v461, 0.0
        %465 = vadd.xlane.f32.xlu0 %v464
        %v466 = vpop.xlane.xlu0 %465
        %v467 = vadd.f32 %v463, %v466
        %vm468 = vcmask 7168
        %469 = vst.msk [vmem:[#allocation3] sm:$0xff] %vm468, %v467
        %v470 = vld [vmem:[#allocation4] sm:$0xff]
        %472 = vset.pattern.permute.xlu0 0
        %473 = vperm.xlu0 %472, %v453
        %v474 = vpop.permute.xlu0 %473
        %v476 = vmul.f32 %v474, %v470
        %v477 = vpack.c.bf16 %v461, %v461
        %v479 = vsel %vm426, %v477, 0
        %vm481 = vcmask 1043456
        %v483 = vsel %vm481, %v425, 0
        %485 = vmatpush.bf16.msra.mxu0 0
        %486 = vmatpush.bf16.msra.mxu0 0
        %487 = vmatpush.bf16.msra.mxu0 0
        %488 = vmatpush.bf16.msra.mxu0 0
        %489 = vmatpush.bf16.msra.mxu0 0
        %490 = vmatpush.bf16.msra.mxu0 0
        %491 = vmatpush.bf16.msra.mxu0 0
        %492 = vmatpush.bf16.msra.mxu0 %v483
        %493 = vmatmul.bf16.gmra.mxu0 %v479
        %v494 = vpop.f32.mrf.mxu0
        %v495 = vadd.f32 0.0, %v494
        %v496 = vpop.f32.mrf.mxu0
        %497 = vdwg.mxu0
        %v498 = vadd.f32 %v476, %v495
        %vm499 = vcmask 130048
        %500 = vst.msk [vmem:[#allocation4] sm:$0xff] %vm499, %v498
        %501 = vst.msk [vmem:[#allocation2] sm:$0xff] %vm468, %v450
        %s502 = scalar_lea.vmem %s365, 4 [#allocation5]
        %v503 = vld [vmem:[%s502] sm:$0xf]
        %s504 = scalar_lea.vmem %s372, 4 [#allocation6]
        %v505 = vld [vmem:[%s504] sm:$0xf]
        %s506 = scalar_lea.vmem %s379, 4 [#allocation7]
        %v507 = vld [vmem:[%s506] sm:$0xf]
        %v509 = vsel %vm426, %v503, 0
        %v512 = vsel %vm426, %v505, 0
        %514 = vmatpush.bf16.xpose.msra.mxu0 0
        %515 = vmatpush.bf16.xpose.msra.mxu0 0
        %516 = vmatpush.bf16.xpose.msra.mxu0 0
        %517 = vmatpush.bf16.xpose.msra.mxu0 0
        %518 = vmatpush.bf16.xpose.msra.mxu0 0
        %519 = vmatpush.bf16.xpose.msra.mxu0 0
        %520 = vmatpush.bf16.xpose.msra.mxu0 0
        %521 = vmatpush.bf16.xpose.msra.mxu0 %v512
        %522 = vmatmul.bf16.gmra.mxu0 %v509
        %v523 = vpop.f32.mrf.mxu0
        %v524 = vadd.f32 0.0, %v523
        %v525 = vpop.f32.mrf.mxu0
        %526 = vdwg.mxu0
        %s527 = scalar_lea.vmem [#allocation2], 8
        %v528 = vld [vmem:[%s527] sm:$0xff]
        %v529 = vsel %vm426, %v524, -inf
        %530 = vmax.xlane.f32.xlu0 %v529
        %v531 = vpop.xlane.xlu0 %530
        %v532 = vmax.f32 %v528, %v531
        %v533 = vsub.f32 %v528, %v532
        %v534 = vmul.f32 %v533, 1.442695
        %v535 = vpow.pop %v534
        %537 = vset.pattern.permute.xlu0 0
        %538 = vperm.xlu0 %537, %v532
        %v539 = vpop.permute.xlu0 %538
        %v541 = vsub.f32 %v524, %v539
        %v542 = vmul.f32 %v541, 1.442695
        %v543 = vpow.pop %v542
        %s544 = scalar_lea.vmem [#allocation3], 8
        %v545 = vld [vmem:[%s544] sm:$0xff]
        %v546 = vmul.f32 %v535, %v545
        %v547 = vsel %vm426, %v543, 0.0
        %548 = vadd.xlane.f32.xlu0 %v547
        %v549 = vpop.xlane.xlu0 %548
        %v550 = vadd.f32 %v546, %v549
        %551 = vst.msk [vmem:[%s544] sm:$0xff] %vm468, %v550
        %s552 = scalar_lea.vmem [#allocation4], 8
        %v553 = vld [vmem:[%s552] sm:$0xff]
        %555 = vset.pattern.permute.xlu0 0
        %556 = vperm.xlu0 %555, %v535
        %v557 = vpop.permute.xlu0 %556
        %v559 = vmul.f32 %v557, %v553
        %v560 = vpack.c.bf16 %v543, %v543
        %v562 = vsel %vm426, %v560, 0
        %v565 = vsel %vm481, %v507, 0
        %567 = vmatpush.bf16.msra.mxu0 0
        %568 = vmatpush.bf16.msra.mxu0 0
        %569 = vmatpush.bf16.msra.mxu0 0
        %570 = vmatpush.bf16.msra.mxu0 0
        %571 = vmatpush.bf16.msra.mxu0 0
        %572 = vmatpush.bf16.msra.mxu0 0
        %573 = vmatpush.bf16.msra.mxu0 0
        %574 = vmatpush.bf16.msra.mxu0 %v565
        %575 = vmatmul.bf16.gmra.mxu0 %v562
        %v576 = vpop.f32.mrf.mxu0
        %v577 = vadd.f32 0.0, %v576
        %v578 = vpop.f32.mrf.mxu0
        %579 = vdwg.mxu0
        %v580 = vadd.f32 %v559, %v577
        %581 = vst.msk [vmem:[%s552] sm:$0xff] %vm499, %v580
        %582 = vst.msk [vmem:[%s527] sm:$0xff] %vm468, %v532
        %p583 = scmp.eq.s32.totalorder %s25, 1
        // Predicated region
        $region164: #{tpu_custom_call.1} parent=146 // pred_check
          %p584 = pneg %p583
        $region165: #{tpu_custom_call.1} parent=146 // pred_check_branch
          %586 = sbr.rel (%p584) target = $region167
        $region166: #{tpu_custom_call.1} parent=146 // pred_region
          %v587 = vld [vmem:[#allocation4] sm:$0xff]
          %v588 = vld [vmem:[#allocation3] sm:$0xff]
          %v589 = vrcp.pop %v588
          %591 = vset.pattern.permute.xlu0 0
          %592 = vperm.xlu0 %591, %v589
          %v593 = vpop.permute.xlu0 %592
          %v595 = vmul.f32 %v587, %v593
          %v596 = vpack.c.bf16 %v595, %v595
          %v597 = vld [vmem:[%s3] sm:$0xf]
          %v598 = vld [vmem:[%s3 + $0x4] sm:$0xf]
          %v599 = vld [vmem:[%s552] sm:$0xff]
          %v600 = vld [vmem:[%s544] sm:$0xff]
          %v601 = vrcp.pop %v600
          %603 = vset.pattern.permute.xlu0 0
          %604 = vperm.xlu0 %603, %v601
          %v605 = vpop.permute.xlu0 %604
          %v607 = vmul.f32 %v599, %v605
          %v608 = vpack.c.bf16 %v607, %v607
          %s609 = scalar_lea.vmem %s3, 8
          %v610 = vld [vmem:[%s609] sm:$0xf]
          %v611 = vld [vmem:[%s609 + $0x4] sm:$0xf]
          %v614 = vunpack.c.l.b16 %v610
          %v615 = vunpack.c.l.b16 %v611
          %v616 = vpack.c.b16 %v615, %v614
          %v619 = vsel %vm499, %v608, 0
          %621 = vmatpush.bf16.msra.mxu0 0
          %622 = vmatpush.bf16.msra.mxu0 0
          %623 = vmatpush.bf16.msra.mxu0 0
          %624 = vmatpush.bf16.msra.mxu0 0
          %625 = vmatpush.bf16.msra.mxu0 0
          %626 = vmatpush.bf16.msra.mxu0 0
          %627 = vmatpush.bf16.msra.mxu0 0
          %628 = vmatpush.bf16.msra.mxu0 %v616
          %629 = vmatmul.bf16.gmra.mxu0 %v619
          %v630 = vpop.f32.mrf.mxu0
          %v631 = vadd.f32 0.0, %v630
          %v632 = vpop.f32.mrf.mxu0
          %633 = vdwg.mxu0
          %v636 = vunpack.c.l.b16 %v597
          %v637 = vunpack.c.l.b16 %v598
          %v638 = vpack.c.b16 %v637, %v636
          %v641 = vsel %vm499, %v596, 0
          %643 = vmatpush.bf16.msra.mxu0 0
          %644 = vmatpush.bf16.msra.mxu0 0
          %645 = vmatpush.bf16.msra.mxu0 0
          %646 = vmatpush.bf16.msra.mxu0 0
          %647 = vmatpush.bf16.msra.mxu0 0
          %648 = vmatpush.bf16.msra.mxu0 0
          %649 = vmatpush.bf16.msra.mxu0 0
          %650 = vmatpush.bf16.msra.mxu0 %v638
          %651 = vmatmul.bf16.gmra.mxu0 %v641
          %v652 = vpop.f32.mrf.mxu0
          %v653 = vadd.f32 %v631, %v652
          %v654 = vpop.f32.mrf.mxu0
          %655 = vdwg.mxu0
          %vm656 = vcmask 261120
          %657 = vst.msk [vmem:[%s409] sm:$0xff] %vm656, %v653
        $region167: #{tpu_custom_call.1} parent=146 // pred_fallthru
          _
        %s658 = sand.u32 %s152, 1
        %s659 = scalar_lea.sflag [#allocation9], %s658
        %s660 = sand.u32 %s152, 1
        %s661 = smul.addr %s660, 8
        %s662 = scalar_lea.vmem [#allocation8], %s661
        // Predicated region
        $region168: #{tpu_custom_call.1} parent=146 // pred_check
          %p663 = pneg %p162
        $region169: #{tpu_custom_call.1} parent=146 // pred_check_branch
          %665 = sbr.rel (%p663) target = $region171
        $region170: #{tpu_custom_call.1} parent=146 // pred_region
          %667 = vsyncadd %s659, 0
          %s668 = smul.addr %s23, 2
          %s669 = sadd.s32 %s24, %s668
          %s670 = smul.addr %s669, 8
          %s671 = scalar_lea.hbm %s4, %s670
          %s673 = sshll.u32 %s662, 4
          %s674 = int_to_ptr.vmem [resolvable:$true] %s673
          %s675 = sshll.u32 %s671, 4
          %s676 = int_to_ptr.hbm [resolvable:$true] %s675
          %678 = dma.vmem_to_hbm [thread:$0]  %s674, 128, %s676, %s659
        $region171: #{tpu_custom_call.1} parent=146 // pred_fallthru
          _
      $region147: #{tpu_custom_call.1} parent=5 // pred_fallthru
        _
      %p679 = scmp.le.s32.totalorder 2, %s13
      // Predicated region
      $region172: #{tpu_custom_call.1} parent=5 // pred_check
        %p680 = pneg %p679
      $region173: #{tpu_custom_call.1} parent=5 // pred_check_branch
        %682 = sbr.rel (%p680) target = $region175
      $region174: #{tpu_custom_call.1} parent=5 // pred_region
        %s683 = ssub.s32 %s13, 2
        // Predicated region
        $region176: #{tpu_custom_call.1} parent=174 // pred_check
          %p684 = pneg %p168
        $region177: #{tpu_custom_call.1} parent=174 // pred_check_branch
          %686 = sbr.rel (%p684) target = $region179
        $region178: #{tpu_custom_call.1} parent=174 // pred_region
          %s687 = sand.u32 %s153, 1
          %s688 = scalar_lea.sflag [#allocation9], %s687
          %s689 = sand.u32 %s153, 1
          %s690 = smul.addr %s689, 8
          %s691 = scalar_lea.vmem [#allocation8], %s690
          %693 = dma.done %s688, 128
        $region179: #{tpu_custom_call.1} parent=174 // pred_fallthru
          _
      $region175: #{tpu_custom_call.1} parent=5 // pred_fallthru
        _
    $region6: #{tpu_custom_call.1} parent=1 // loop_footer
      %s17 = sadd.s32 1, %s13
    $region7: #{tpu_custom_call.1} parent=1 // loop_footer_branch
      %12 = sbr.rel target = $region3
    $region8: #{tpu_custom_call.1} parent=1 // loop_exit
      _
    %694 = vsyncpa [#allocation9], 1
    %s695 = scalar_lea.sflag [#allocation9], 1
    %696 = vsyncpa %s695, 1

</llo_original>
